<compile_context>
chip_gen: v7x
topology: tpu7x:2x2x1
jax: 0.10.0
libtpu: 0.0.40
codegen_flags: <defaults>
</compile_context>

<pallas_src>
import functools

import jax
import jax.numpy as jnp
from jax.experimental import pallas as pl
from jax.experimental.pallas import tpu as pltpu


# ---------------------------------------------------------------------------
# Kernel 1: theta = init + lambdas * (2*sigmoid(MLP(GAP(x[0]))) - 1)
# Only batch row 0 is consumed by the module (theta[0, :]), so the x BlockSpec
# pins the batch index to 0 and the grid reduces over spatial (HW) tiles with
# an f32 accumulator held in VMEM scratch.
# ---------------------------------------------------------------------------
def _theta_kernel(x_ref, w1_ref, b1_ref, w2_ref, b2_ref, lam_ref, init_ref,
                  theta_ref, acc_ref, *, inv_hw):
    j = pl.program_id(0)

    @pl.when(j == 0)
    def _():
        acc_ref[...] = jnp.zeros_like(acc_ref)

    # x_ref: (1, C, T) tile of the batch-0 slab; accumulate channel sums in f32.
    acc_ref[...] += jnp.sum(x_ref[...].astype(jnp.float32), axis=-1)

    @pl.when(j == pl.num_programs(0) - 1)
    def _():
        gap = acc_ref[...] * inv_hw                                  # (1, C)
        h = jnp.dot(gap, w1_ref[...],
                    preferred_element_type=jnp.float32) + b1_ref[...]
        h = jnp.maximum(h, 0.0)                                      # ReLU
        logits = jnp.dot(h, w2_ref[...],
                         preferred_element_type=jnp.float32) + b2_ref[...]
        residuals = 2.0 * jax.nn.sigmoid(logits) - 1.0
        theta_ref[...] = init_ref[...] + lam_ref[...] * residuals    # (1, 4)


# ---------------------------------------------------------------------------
# Kernel 2: out = max(a0*x + b0, a1*x + b1), theta coefficients from SMEM.
# ---------------------------------------------------------------------------
def _apply_kernel(theta_ref, x_ref, o_ref):
    a0 = theta_ref[0]
    a1 = theta_ref[1]
    b0 = theta_ref[2]
    b1 = theta_ref[3]
    x = x_ref[...].astype(jnp.float32)      # f32 VPU math (v5e has no bf16 VALU)
    y = jnp.maximum(a0 * x + b0, a1 * x + b1)
    o_ref[...] = y.astype(o_ref.dtype)


def _pick_hw_tile(hw, c):
    """Largest multiple-of-128 divisor of hw such that a (1, c, t) f32 tile
    stays around <= 2 MiB (double-buffered, well under every generation's
    scoped VMEM). Falls back to the full extent when hw is not lane-aligned."""
    if hw % 128 != 0:
        return hw                      # full-extent block (exempt from (8,128))
    cap = max(128, ((512 * 1024) // max(c, 1)) // 128 * 128)
    best = 128
    t = 128
    while t <= min(hw, cap):
        if hw % t == 0:
            best = t
        t += 128
    return best


def make_params(channels, reduction=8, k=2, key=jax.random.PRNGKey(0)):
    """Deterministic synthetic parameters (weights stored pre-transposed: (in, out))."""
    hidden = channels // reduction
    k1, k2, k3, k4 = jax.random.split(key, 4)
    return dict(
        w1=jax.random.normal(k1, (channels, hidden), jnp.float32) * 0.1,
        b1=jax.random.normal(k2, (1, hidden), jnp.float32) * 0.1,
        w2=jax.random.normal(k3, (hidden, 2 * k), jnp.float32) * 0.1,
        b2=jax.random.normal(k4, (1, 2 * k), jnp.float32) * 0.1,
        lambdas=jnp.array([[1.0, 1.0, 0.5, 0.5]], jnp.float32),
        init_values=jnp.array([[1.0, 0.0, 0.0, 0.0]], jnp.float32),
    )


def dyrelu_a(x_nchw, params, *, lane=1024, row_tile=256):
    n, c, h, w = x_nchw.shape
    hw = h * w
    dtype = x_nchw.dtype
    hidden = params["w1"].shape[1]

    # -------------------------------------------------------------- theta pass
    x3 = x_nchw.reshape(n, c, hw)                  # free reshape, native dtype
    t_hw = _pick_hw_tile(hw, c)
    theta = pl.pallas_call(
        functools.partial(_theta_kernel, inv_hw=1.0 / hw),
        out_shape=jax.ShapeDtypeStruct((1, 4), jnp.float32),
        grid=(hw // t_hw,),
        in_specs=[
            pl.BlockSpec((1, c, t_hw), lambda j: (0, 0, j)),  # only batch 0 read
            pl.BlockSpec((c, hidden), lambda j: (0, 0)),
            pl.BlockSpec((1, hidden), lambda j: (0, 0)),
            pl.BlockSpec((hidden, 4), lambda j: (0, 0)),
            pl.BlockSpec((1, 4), lambda j: (0, 0)),
            pl.BlockSpec((1, 4), lambda j: (0, 0)),
            pl.BlockSpec((1, 4), lambda j: (0, 0)),
        ],
        out_specs=pl.BlockSpec((1, 4), lambda j: (0, 0)),
        scratch_shapes=[pltpu.VMEM((1, c), jnp.float32)],
        compiler_params=pltpu.CompilerParams(
            dimension_semantics=("arbitrary",)),               # reduction axis
    )(x3, params["w1"], params["b1"], params["w2"], params["b2"],
      params["lambdas"], params["init_values"])
    theta_flat = theta.reshape(4)

    # -------------------------------------------------------------- apply pass
    # Elementwise with scalar coefficients -> flatten to a lane-dense
    # (rows, lane) slab so stores are full-lane unmasked vst, and grid over
    # ~1 MiB row tiles (2 double-buffered in+out tiles ~ 4 MiB of VMEM).
    total = n * c * hw
    flat = x_nchw.reshape(total)
    pad = (-total) % lane
    if pad:
        flat = jnp.pad(flat, (0, pad))             # rare fallback path
    rows = flat.shape[0] // lane
    x2d = flat.reshape(rows, lane)
    bt = rows if rows <= row_tile else row_tile    # full dim or multiple of 8

    out2d = pl.pallas_call(
        _apply_kernel,
        out_shape=jax.ShapeDtypeStruct((rows, lane), dtype),
        grid=(pl.cdiv(rows, bt),),
        in_specs=[
            pl.BlockSpec(memory_space=pltpu.MemorySpace.SMEM),  # theta (4,)
            pl.BlockSpec((bt, lane), lambda i: (i, 0)),
        ],
        out_specs=pl.BlockSpec((bt, lane), lambda i: (i, 0)),
        compiler_params=pltpu.CompilerParams(
            dimension_semantics=("parallel",)),     # shards across v7x's 2 TCs
    )(theta_flat, x2d)

    out_flat = out2d.reshape(-1)
    if pad:
        out_flat = out_flat[:total]
    return out_flat.reshape(n, c, h, w)


def dyrelu_ref(x, p):
    """Pure-JAX reference mirroring the PyTorch forward."""
    gap = jnp.mean(x, axis=(2, 3))                           # (N, C)
    h = jax.nn.relu(gap @ p["w1"] + p["b1"])
    logits = h @ p["w2"] + p["b2"]
    residuals = 2.0 * jax.nn.sigmoid(logits) - 1.0
    theta = p["init_values"] + p["lambdas"] * residuals
    a = theta[0, :2]
    b = theta[0, 2:]
    return jnp.maximum(a[0] * x + b[0], a[1] * x + b[1])


if __name__ == "__main__":
    key = jax.random.PRNGKey(0)
    kx, kp = jax.random.split(key)

    channels = 32   # reduction=8 -> hidden=4, k=2 -> 4 output coeffs
    x = jax.random.normal(kx, (2, channels, 16, 16), jnp.float32)  # NCHW
    params = make_params(channels, key=kp)

    out = dyrelu_a(x, params)
    jax.block_until_ready(out)

    ref = dyrelu_ref(x, params)
    assert out.shape == x.shape and out.dtype == x.dtype
    assert jnp.allclose(out, ref, atol=1e-5, rtol=1e-5), "mismatch vs JAX reference"

    print("KERNEL_OK")
</pallas_src>

<mosaic_0001>
module attributes {stable_mosaic.version = 11 : i64} {
  func.func @_theta_kernel(%arg0: i32, %arg1: memref<1x32x256xf32, #tpu.memory_space<vmem>>, %arg2: memref<32x4xf32, #tpu.memory_space<vmem>>, %arg3: memref<1x4xf32, #tpu.memory_space<vmem>>, %arg4: memref<4x4xf32, #tpu.memory_space<vmem>>, %arg5: memref<1x4xf32, #tpu.memory_space<vmem>>, %arg6: memref<1x4xf32, #tpu.memory_space<vmem>>, %arg7: memref<1x4xf32, #tpu.memory_space<vmem>>, %arg8: memref<1x4xf32, #tpu.memory_space<vmem>>, %arg9: memref<1x32xf32, #tpu.memory_space<vmem>>) attributes {dimension_semantics = [#tpu.dimension_semantics<arbitrary>], iteration_bounds = array<i64: 1>, scalar_prefetch = 0 : i64, scratch_operands = 1 : i64, tpu.core_type = #tpu.core_type<tc>, window_params = [{transform_indices = @transform_0, window_bounds = array<i64: 1, 32, 256>}, {pipeline_mode = #tpu.pipeline_mode<synchronous>, transform_indices = @transform_1, window_bounds = array<i64: 32, 4>}, {pipeline_mode = #tpu.pipeline_mode<synchronous>, transform_indices = @transform_2, window_bounds = array<i64: 1, 4>}, {pipeline_mode = #tpu.pipeline_mode<synchronous>, transform_indices = @transform_3, window_bounds = array<i64: 4, 4>}, {pipeline_mode = #tpu.pipeline_mode<synchronous>, transform_indices = @transform_4, window_bounds = array<i64: 1, 4>}, {pipeline_mode = #tpu.pipeline_mode<synchronous>, transform_indices = @transform_5, window_bounds = array<i64: 1, 4>}, {pipeline_mode = #tpu.pipeline_mode<synchronous>, transform_indices = @transform_6, window_bounds = array<i64: 1, 4>}, {pipeline_mode = #tpu.pipeline_mode<synchronous>, transform_indices = @transform_7, window_bounds = array<i64: 1, 4>}]} {
    %c0_i32 = arith.constant 0 : i32
    %0 = arith.cmpi eq, %arg0, %c0_i32 : i32
    %1 = arith.extui %0 : i1 to i32
    %c0_i32_0 = arith.constant 0 : i32
    %2 = arith.cmpi ne, %1, %c0_i32_0 : i32
    scf.if %2 {
      %cst_9 = arith.constant 0.000000e+00 : f32
      %11 = vector.broadcast %cst_9 : f32 to vector<1x32xf32>
      %c0_10 = arith.constant 0 : index
      %c0_11 = arith.constant 0 : index
      %12 = vector.load %arg9[%c0_10, %c0_11] : memref<1x32xf32, #tpu.memory_space<vmem>>, vector<1x32xf32>
      tpu.vector_store %arg9[%c0_10, %c0_11], %11 {strides = array<i32>} : memref<1x32xf32, #tpu.memory_space<vmem>>, vector<1x32xf32>,
    } else {
    }
    %c0 = arith.constant 0 : index
    %c0_1 = arith.constant 0 : index
    %3 = vector.load %arg9[%c0, %c0_1] : memref<1x32xf32, #tpu.memory_space<vmem>>, vector<1x32xf32>
    %c0_2 = arith.constant 0 : index
    %c0_3 = arith.constant 0 : index
    %c0_4 = arith.constant 0 : index
    %4 = vector.load %arg1[%c0_2, %c0_3, %c0_4] : memref<1x32x256xf32, #tpu.memory_space<vmem>>, vector<1x32x256xf32>
    %cst = arith.constant dense<0.000000e+00> : vector<1x32xf32>
    %5 = vector.multi_reduction <add>, %4, %cst [2] : vector<1x32x256xf32> to vector<1x32xf32>
    %6 = arith.addf %3, %5 : vector<1x32xf32>
    %c0_5 = arith.constant 0 : index
    %c0_6 = arith.constant 0 : index
    %7 = vector.load %arg9[%c0_5, %c0_6] : memref<1x32xf32, #tpu.memory_space<vmem>>, vector<1x32xf32>
    tpu.vector_store %arg9[%c0_5, %c0_6], %6 {strides = array<i32>} : memref<1x32xf32, #tpu.memory_space<vmem>>, vector<1x32xf32>,
    %c0_i32_7 = arith.constant 0 : i32
    %8 = arith.cmpi eq, %arg0, %c0_i32_7 : i32
    %9 = arith.extui %8 : i1 to i32
    %c0_i32_8 = arith.constant 0 : i32
    %10 = arith.cmpi ne, %9, %c0_i32_8 : i32
    scf.if %10 {
      %c0_9 = arith.constant 0 : index
      %c0_10 = arith.constant 0 : index
      %11 = vector.load %arg9[%c0_9, %c0_10] : memref<1x32xf32, #tpu.memory_space<vmem>>, vector<1x32xf32>
      %cst_11 = arith.constant 3.906250e-03 : f32
      %12 = vector.broadcast %cst_11 : f32 to vector<1x32xf32>
      %13 = arith.mulf %11, %12 : vector<1x32xf32>
      %c0_12 = arith.constant 0 : index
      %c0_13 = arith.constant 0 : index
      %14 = vector.load %arg2[%c0_12, %c0_13] : memref<32x4xf32, #tpu.memory_space<vmem>>, vector<32x4xf32>
      %cst_14 = arith.constant dense<0.000000e+00> : vector<1x4xf32>
      %15 = tpu.matmul %13, %14, %cst_14 {dimension_numbers = #tpu.dot_dimension_numbers<[1], [0], [0], [1], [0, 0, 1, 1], [], []>} : vector<1x32xf32>, vector<32x4xf32>, vector<1x4xf32> -> vector<1x4xf32>
      %c0_15 = arith.constant 0 : index
      %c0_16 = arith.constant 0 : index
      %16 = vector.load %arg3[%c0_15, %c0_16] : memref<1x4xf32, #tpu.memory_space<vmem>>, vector<1x4xf32>
      %17 = arith.addf %15, %16 : vector<1x4xf32>
      %cst_17 = arith.constant 0.000000e+00 : f32
      %18 = vector.broadcast %cst_17 : f32 to vector<1x4xf32>
      %19 = arith.maximumf %17, %18 : vector<1x4xf32>
      %c0_18 = arith.constant 0 : index
      %c0_19 = arith.constant 0 : index
      %20 = vector.load %arg4[%c0_18, %c0_19] : memref<4x4xf32, #tpu.memory_space<vmem>>, vector<4x4xf32>
      %cst_20 = arith.constant dense<0.000000e+00> : vector<1x4xf32>
      %21 = tpu.matmul %19, %20, %cst_20 {dimension_numbers = #tpu.dot_dimension_numbers<[1], [0], [0], [1], [0, 0, 1, 1], [], []>} : vector<1x4xf32>, vector<4x4xf32>, vector<1x4xf32> -> vector<1x4xf32>
      %c0_21 = arith.constant 0 : index
      %c0_22 = arith.constant 0 : index
      %22 = vector.load %arg5[%c0_21, %c0_22] : memref<1x4xf32, #tpu.memory_space<vmem>>, vector<1x4xf32>
      %23 = arith.addf %21, %22 : vector<1x4xf32>
      %24 = arith.negf %23 : vector<1x4xf32>
      %25 = math.exp %24 : vector<1x4xf32>
      %cst_23 = arith.constant 1.000000e+00 : f32
      %26 = vector.broadcast %cst_23 : f32 to vector<1x4xf32>
      %27 = arith.addf %26, %25 : vector<1x4xf32>
      %28 = arith.divf %26, %27 : vector<1x4xf32>
      %cst_24 = arith.constant 2.000000e+00 : f32
      %29 = vector.broadcast %cst_24 : f32 to vector<1x4xf32>
      %30 = arith.mulf %29, %28 : vector<1x4xf32>
      %cst_25 = arith.constant 1.000000e+00 : f32
      %31 = vector.broadcast %cst_25 : f32 to vector<1x4xf32>
      %32 = arith.subf %30, %31 : vector<1x4xf32>
      %c0_26 = arith.constant 0 : index
      %c0_27 = arith.constant 0 : index
      %33 = vector.load %arg7[%c0_26, %c0_27] : memref<1x4xf32, #tpu.memory_space<vmem>>, vector<1x4xf32>
      %c0_28 = arith.constant 0 : index
      %c0_29 = arith.constant 0 : index
      %34 = vector.load %arg6[%c0_28, %c0_29] : memref<1x4xf32, #tpu.memory_space<vmem>>, vector<1x4xf32>
      %35 = arith.mulf %34, %32 : vector<1x4xf32>
      %36 = arith.addf %33, %35 : vector<1x4xf32>
      %c0_30 = arith.constant 0 : index
      %c0_31 = arith.constant 0 : index
      %37 = vector.load %arg8[%c0_30, %c0_31] : memref<1x4xf32, #tpu.memory_space<vmem>>, vector<1x4xf32>
      tpu.vector_store %arg8[%c0_30, %c0_31], %36 {strides = array<i32>} : memref<1x4xf32, #tpu.memory_space<vmem>>, vector<1x4xf32>,
    } else {
    }
    return
  }
  func.func @transform_0(%arg0: i32) -> (i32, i32, i32) {
    %c0_i32 = arith.constant 0 : i32
    %c0_i32_0 = arith.constant 0 : i32
    %c0_i32_1 = arith.constant 0 : i32
    return %c0_i32, %c0_i32_0, %arg0 : i32, i32, i32
  }
  func.func @transform_1(%arg0: i32) -> (i32, i32) {
    %c0_i32 = arith.constant 0 : i32
    %c0_i32_0 = arith.constant 0 : i32
    %c0_i32_1 = arith.constant 0 : i32
    return %c0_i32, %c0_i32_0 : i32, i32
  }
  func.func @transform_2(%arg0: i32) -> (i32, i32) {
    %c0_i32 = arith.constant 0 : i32
    %c0_i32_0 = arith.constant 0 : i32
    %c0_i32_1 = arith.constant 0 : i32
    return %c0_i32, %c0_i32_0 : i32, i32
  }
  func.func @transform_3(%arg0: i32) -> (i32, i32) {
    %c0_i32 = arith.constant 0 : i32
    %c0_i32_0 = arith.constant 0 : i32
    %c0_i32_1 = arith.constant 0 : i32
    return %c0_i32, %c0_i32_0 : i32, i32
  }
  func.func @transform_4(%arg0: i32) -> (i32, i32) {
    %c0_i32 = arith.constant 0 : i32
    %c0_i32_0 = arith.constant 0 : i32
    %c0_i32_1 = arith.constant 0 : i32
    return %c0_i32, %c0_i32_0 : i32, i32
  }
  func.func @transform_5(%arg0: i32) -> (i32, i32) {
    %c0_i32 = arith.constant 0 : i32
    %c0_i32_0 = arith.constant 0 : i32
    %c0_i32_1 = arith.constant 0 : i32
    return %c0_i32, %c0_i32_0 : i32, i32
  }
  func.func @transform_6(%arg0: i32) -> (i32, i32) {
    %c0_i32 = arith.constant 0 : i32
    %c0_i32_0 = arith.constant 0 : i32
    %c0_i32_1 = arith.constant 0 : i32
    return %c0_i32, %c0_i32_0 : i32, i32
  }
  func.func @transform_7(%arg0: i32) -> (i32, i32) {
    %c0_i32 = arith.constant 0 : i32
    %c0_i32_0 = arith.constant 0 : i32
    %c0_i32_1 = arith.constant 0 : i32
    return %c0_i32, %c0_i32_0 : i32, i32
  }
}

</mosaic_0001>

<llo_original>
// kernel: tpu_custom_call.1
$region0: #{tpu_custom_call.1}
  #allocation0 [shape = 'u32[]', space=smem, size = 0x4, offset = 0x4, fixed_abs, tag = 'smem constant byte address 0x4 - core index']
  #allocation1 [shape = 'u32[144,128]{1,0:T(1,128)}', space=vmem, size = 0x12000, scoped, tag = 'internal scratch']
  #allocation2 [shape = 'f32[1,32]{1,0:T(1,128)}', space=vmem, size = 0x200, scoped, tag = 'scratch operand']
  %s0 = inlined_call_operand.hbm [shape: f32[2,32,256], index: 0, kind: input, shape index: {}]
  %s1 = inlined_call_operand.vmem [shape: f32[32,4], index: 1, kind: input, shape index: {}]
  %s2 = inlined_call_operand.vmem [shape: f32[1,4], index: 2, kind: input, shape index: {}]
  %s3 = inlined_call_operand.vmem [shape: f32[4,4], index: 3, kind: input, shape index: {}]
  %s4 = inlined_call_operand.vmem [shape: f32[1,4], index: 4, kind: input, shape index: {}]
  %s5 = inlined_call_operand.vmem [shape: f32[1,4], index: 5, kind: input, shape index: {}]
  %s6 = inlined_call_operand.vmem [shape: f32[1,4], index: 6, kind: input, shape index: {}]
  %s7 = inlined_call_operand.hbm [shape: f32[1,4], index: 7, kind: output, shape index: {}]
  %s8 = sld [smem:[#allocation0]]
  $region50: #{tpu_custom_call.1} parent=0
    _
  %s10 = ssub.s32 1, %s8
  %s11 = scalar_select 0, %s10, %s8
  $region1: #{tpu_custom_call.1} parent=0
    #allocation3 [shape = 'u8[32768]{0}', space=vmem, size = 0x8000, scoped, tag = 'input window, operand 0, single buffered']
    #allocation4 [shape = 's32[1]{0}', space=sflag, size = 0x4, scoped, tag = 'scoped memory for tpu_custom_call.1']
    #allocation5 [shape = 's32[1]{0}', space=sflag, size = 0x4, scoped, tag = 'scoped memory for tpu_custom_call.1']
    #allocation6 [shape = 'u8[512]{0}', space=vmem, size = 0x400, scoped, tag = 'output window, operand 0, single buffered']
    %12 = vsyncpa [#allocation4], 0
    %13 = vsyncpa [#allocation5], 0
    // Predicated region
    $region2: #{tpu_custom_call.1} parent=1 // pred_check
      _
    $region3: #{tpu_custom_call.1} parent=1 // pred_check_branch
      %15 = sbr.rel (0) target = $region5
    $region4: #{tpu_custom_call.1} parent=1 // pred_region
      %s17 = ssub.s32 1024, 1024
      %18 = vsyncadd [#allocation4], %s17
      %s19 = sshll.u32 [#allocation3], 4
      %s20 = int_to_ptr.vmem [resolvable:$true] %s19
      %25 = dma.hbm_to_vmem [thread:$0]  %s0, 1024, %s20, [#allocation4], 256, 256, 16
    $region5: #{tpu_custom_call.1} parent=1 // pred_fallthru
      _
    // Predicated region
    $region6: #{tpu_custom_call.1} parent=1 // pred_check
      _
    $region7: #{tpu_custom_call.1} parent=1 // pred_check_branch
      %27 = sbr.rel (0) target = $region9
    $region8: #{tpu_custom_call.1} parent=1 // pred_region
      _
    $region9: #{tpu_custom_call.1} parent=1 // pred_fallthru
      _
    // Predicated region
    $region10: #{tpu_custom_call.1} parent=1 // pred_check
      _
    $region11: #{tpu_custom_call.1} parent=1 // pred_check_branch
      %29 = sbr.rel (0) target = $region13
    $region12: #{tpu_custom_call.1} parent=1 // pred_region
      _
    $region13: #{tpu_custom_call.1} parent=1 // pred_fallthru
      _
    // Predicated region
    $region14: #{tpu_custom_call.1} parent=1 // pred_check
      _
    $region15: #{tpu_custom_call.1} parent=1 // pred_check_branch
      %31 = sbr.rel (0) target = $region17
    $region16: #{tpu_custom_call.1} parent=1 // pred_region
      _
    $region17: #{tpu_custom_call.1} parent=1 // pred_fallthru
      _
    // Predicated region
    $region18: #{tpu_custom_call.1} parent=1 // pred_check
      _
    $region19: #{tpu_custom_call.1} parent=1 // pred_check_branch
      %33 = sbr.rel (0) target = $region21
    $region20: #{tpu_custom_call.1} parent=1 // pred_region
      _
    $region21: #{tpu_custom_call.1} parent=1 // pred_fallthru
      _
    // Predicated region
    $region22: #{tpu_custom_call.1} parent=1 // pred_check
      _
    $region23: #{tpu_custom_call.1} parent=1 // pred_check_branch
      %35 = sbr.rel (0) target = $region25
    $region24: #{tpu_custom_call.1} parent=1 // pred_region
      _
    $region25: #{tpu_custom_call.1} parent=1 // pred_fallthru
      _
    // Predicated region
    $region26: #{tpu_custom_call.1} parent=1 // pred_check
      _
    $region27: #{tpu_custom_call.1} parent=1 // pred_check_branch
      %37 = sbr.rel (0) target = $region29
    $region28: #{tpu_custom_call.1} parent=1 // pred_region
      _
    $region29: #{tpu_custom_call.1} parent=1 // pred_fallthru
      _
    // Predicated region
    $region30: #{tpu_custom_call.1} parent=1 // pred_check
      _
    $region31: #{tpu_custom_call.1} parent=1 // pred_check_branch
      %39 = sbr.rel (0) target = $region33
    $region32: #{tpu_custom_call.1} parent=1 // pred_region
      %40 = dma.done [#allocation4], 1024
    $region33: #{tpu_custom_call.1} parent=1 // pred_fallthru
      _
    %p41 = scmp.eq.s32.totalorder 0, 0
    // Predicated region
    $region34: #{tpu_custom_call.1} parent=1 // pred_check
      %p42 = pneg %p41
    $region35: #{tpu_custom_call.1} parent=1 // pred_check_branch
      %44 = sbr.rel (%p42) target = $region37
    $region36: #{tpu_custom_call.1} parent=1 // pred_region
      %vm45 = vcmask 253952
      %46 = vst.msk [vmem:[#allocation2] sm:$0x1] %vm45, 0.0
    $region37: #{tpu_custom_call.1} parent=1 // pred_fallthru
      _
    %v47 = vld [vmem:[#allocation2] sm:$0x1]
    %v48 = vld [vmem:[#allocation3] sm:$0xff]
    %v49 = vld [vmem:[#allocation3 + $0x8] sm:$0xff]
    %v50 = vld [vmem:[#allocation3 + $0x10] sm:$0xff]
    %v51 = vld [vmem:[#allocation3 + $0x18] sm:$0xff]
    %v52 = vld [vmem:[#allocation3 + $0x20] sm:$0xff]
    %v53 = vld [vmem:[#allocation3 + $0x28] sm:$0xff]
    %v54 = vld [vmem:[#allocation3 + $0x30] sm:$0xff]
    %v55 = vld [vmem:[#allocation3 + $0x38] sm:$0xff]
    %v56 = vadd.f32 %v48, %v49
    %57 = vadd.xlane.f32.xlu0 %v56
    %v58 = vpop.xlane.xlu0 %57
    %v59 = vadd.f32 %v50, %v51
    %60 = vadd.xlane.f32.xlu0 %v59
    %v61 = vpop.xlane.xlu0 %60
    %v62 = vadd.f32 %v52, %v53
    %63 = vadd.xlane.f32.xlu0 %v62
    %v64 = vpop.xlane.xlu0 %63
    %v65 = vadd.f32 %v54, %v55
    %66 = vadd.xlane.f32.xlu0 %v65
    %v67 = vpop.xlane.xlu0 %66
    %v72 = vlaneseq
    %v73 = vshrl.u32 %v72, 7
    %v74 = vsub.s32 0, %v73
    %v75 = vrot.slane %v58, %v74
    %v76 = vlaneseq
    %v77 = vshrl.u32 %v76, 7
    %v78 = vsub.s32 1, %v77
    %v79 = vrot.slane %v58, %v78
    %v80 = vlaneseq
    %v81 = vshrl.u32 %v80, 7
    %v82 = vsub.s32 2, %v81
    %v83 = vrot.slane %v58, %v82
    %v84 = vlaneseq
    %v85 = vshrl.u32 %v84, 7
    %v86 = vsub.s32 3, %v85
    %v87 = vrot.slane %v58, %v86
    %v88 = vlaneseq
    %v89 = vshrl.u32 %v88, 7
    %v90 = vsub.s32 4, %v89
    %v91 = vrot.slane %v58, %v90
    %v92 = vlaneseq
    %v93 = vshrl.u32 %v92, 7
    %v94 = vsub.s32 5, %v93
    %v95 = vrot.slane %v58, %v94
    %v96 = vlaneseq
    %v97 = vshrl.u32 %v96, 7
    %v98 = vsub.s32 6, %v97
    %v99 = vrot.slane %v58, %v98
    %v100 = vlaneseq
    %v101 = vshrl.u32 %v100, 7
    %v102 = vsub.s32 7, %v101
    %v103 = vrot.slane %v58, %v102
    %v104 = vlaneseq
    %v105 = vshrl.u32 %v104, 7
    %v106 = vsub.s32 0, %v105
    %v107 = vrot.slane %v61, %v106
    %v108 = vlaneseq
    %v109 = vshrl.u32 %v108, 7
    %v110 = vsub.s32 1, %v109
    %v111 = vrot.slane %v61, %v110
    %v112 = vlaneseq
    %v113 = vshrl.u32 %v112, 7
    %v114 = vsub.s32 2, %v113
    %v115 = vrot.slane %v61, %v114
    %v116 = vlaneseq
    %v117 = vshrl.u32 %v116, 7
    %v118 = vsub.s32 3, %v117
    %v119 = vrot.slane %v61, %v118
    %v120 = vlaneseq
    %v121 = vshrl.u32 %v120, 7
    %v122 = vsub.s32 4, %v121
    %v123 = vrot.slane %v61, %v122
    %v124 = vlaneseq
    %v125 = vshrl.u32 %v124, 7
    %v126 = vsub.s32 5, %v125
    %v127 = vrot.slane %v61, %v126
    %v128 = vlaneseq
    %v129 = vshrl.u32 %v128, 7
    %v130 = vsub.s32 6, %v129
    %v131 = vrot.slane %v61, %v130
    %v132 = vlaneseq
    %v133 = vshrl.u32 %v132, 7
    %v134 = vsub.s32 7, %v133
    %v135 = vrot.slane %v61, %v134
    %v136 = vlaneseq
    %v137 = vshrl.u32 %v136, 7
    %v138 = vsub.s32 0, %v137
    %v139 = vrot.slane %v64, %v138
    %v140 = vlaneseq
    %v141 = vshrl.u32 %v140, 7
    %v142 = vsub.s32 1, %v141
    %v143 = vrot.slane %v64, %v142
    %v144 = vlaneseq
    %v145 = vshrl.u32 %v144, 7
    %v146 = vsub.s32 2, %v145
    %v147 = vrot.slane %v64, %v146
    %v148 = vlaneseq
    %v149 = vshrl.u32 %v148, 7
    %v150 = vsub.s32 3, %v149
    %v151 = vrot.slane %v64, %v150
    %v152 = vlaneseq
    %v153 = vshrl.u32 %v152, 7
    %v154 = vsub.s32 4, %v153
    %v155 = vrot.slane %v64, %v154
    %v156 = vlaneseq
    %v157 = vshrl.u32 %v156, 7
    %v158 = vsub.s32 5, %v157
    %v159 = vrot.slane %v64, %v158
    %v160 = vlaneseq
    %v161 = vshrl.u32 %v160, 7
    %v162 = vsub.s32 6, %v161
    %v163 = vrot.slane %v64, %v162
    %v164 = vlaneseq
    %v165 = vshrl.u32 %v164, 7
    %v166 = vsub.s32 7, %v165
    %v167 = vrot.slane %v64, %v166
    %v168 = vlaneseq
    %v169 = vshrl.u32 %v168, 7
    %v170 = vsub.s32 0, %v169
    %v171 = vrot.slane %v67, %v170
    %v172 = vlaneseq
    %v173 = vshrl.u32 %v172, 7
    %v174 = vsub.s32 1, %v173
    %v175 = vrot.slane %v67, %v174
    %v176 = vlaneseq
    %v177 = vshrl.u32 %v176, 7
    %v178 = vsub.s32 2, %v177
    %v179 = vrot.slane %v67, %v178
    %v180 = vlaneseq
    %v181 = vshrl.u32 %v180, 7
    %v182 = vsub.s32 3, %v181
    %v183 = vrot.slane %v67, %v182
    %v184 = vlaneseq
    %v185 = vshrl.u32 %v184, 7
    %v186 = vsub.s32 4, %v185
    %v187 = vrot.slane %v67, %v186
    %v188 = vlaneseq
    %v189 = vshrl.u32 %v188, 7
    %v190 = vsub.s32 5, %v189
    %v191 = vrot.slane %v67, %v190
    %v192 = vlaneseq
    %v193 = vshrl.u32 %v192, 7
    %v194 = vsub.s32 6, %v193
    %v195 = vrot.slane %v67, %v194
    %v196 = vlaneseq
    %v197 = vshrl.u32 %v196, 7
    %v198 = vsub.s32 7, %v197
    %v199 = vrot.slane %v67, %v198
    %v200 = vcombine.low %v75, %v79
    %v201 = vcombine.low %v83, %v87
    %v202 = vcombine.low %v91, %v95
    %v203 = vcombine.low %v99, %v103
    %v205 = vunpack.c.l.s4 1966171168
    %v206 = vunpack.c.0.s8 %v205
    %v207 = vlaneseq
    %v208 = vshrl.u32 %v207, 7
    %v209 = vsub.s32 %v206, %v208
    %v210 = vrot.slane %v200, %v209
    %v212 = vunpack.c.l.s4 1966171168
    %v213 = vunpack.c.0.s8 %v212
    %v214 = vlaneseq
    %v215 = vshrl.u32 %v214, 7
    %v216 = vsub.s32 %v213, %v215
    %v217 = vrot.slane %v201, %v216
    %v219 = vunpack.c.l.s4 1966171168
    %v220 = vunpack.c.0.s8 %v219
    %v221 = vlaneseq
    %v222 = vshrl.u32 %v221, 7
    %v223 = vsub.s32 %v220, %v222
    %v224 = vrot.slane %v202, %v223
    %v226 = vunpack.c.l.s4 1966171168
    %v227 = vunpack.c.0.s8 %v226
    %v228 = vlaneseq
    %v229 = vshrl.u32 %v228, 7
    %v230 = vsub.s32 %v227, %v229
    %v231 = vrot.slane %v203, %v230
    %v232 = vcombine.low %v210, %v217
    %v233 = vcombine.low %v224, %v231
    %v235 = vunpack.c.l.s4 1966171168
    %v236 = vunpack.c.0.s8 %v235
    %v237 = vlaneseq
    %v238 = vshrl.u32 %v237, 7
    %v239 = vsub.s32 %v236, %v238
    %v240 = vrot.slane %v232, %v239
    %v242 = vunpack.c.l.s4 1966171168
    %v243 = vunpack.c.0.s8 %v242
    %v244 = vlaneseq
    %v245 = vshrl.u32 %v244, 7
    %v246 = vsub.s32 %v243, %v245
    %v247 = vrot.slane %v233, %v246
    %v248 = vcombine.low %v240, %v247
    %v249 = vcombine.low %v107, %v111
    %v250 = vcombine.low %v115, %v119
    %v251 = vcombine.low %v123, %v127
    %v252 = vcombine.low %v131, %v135
    %v254 = vunpack.c.l.s4 1966171168
    %v255 = vunpack.c.0.s8 %v254
    %v256 = vlaneseq
    %v257 = vshrl.u32 %v256, 7
    %v258 = vsub.s32 %v255, %v257
    %v259 = vrot.slane %v249, %v258
    %v261 = vunpack.c.l.s4 1966171168
    %v262 = vunpack.c.0.s8 %v261
    %v263 = vlaneseq
    %v264 = vshrl.u32 %v263, 7
    %v265 = vsub.s32 %v262, %v264
    %v266 = vrot.slane %v250, %v265
    %v268 = vunpack.c.l.s4 1966171168
    %v269 = vunpack.c.0.s8 %v268
    %v270 = vlaneseq
    %v271 = vshrl.u32 %v270, 7
    %v272 = vsub.s32 %v269, %v271
    %v273 = vrot.slane %v251, %v272
    %v275 = vunpack.c.l.s4 1966171168
    %v276 = vunpack.c.0.s8 %v275
    %v277 = vlaneseq
    %v278 = vshrl.u32 %v277, 7
    %v279 = vsub.s32 %v276, %v278
    %v280 = vrot.slane %v252, %v279
    %v281 = vcombine.low %v259, %v266
    %v282 = vcombine.low %v273, %v280
    %v284 = vunpack.c.l.s4 1966171168
    %v285 = vunpack.c.0.s8 %v284
    %v286 = vlaneseq
    %v287 = vshrl.u32 %v286, 7
    %v288 = vsub.s32 %v285, %v287
    %v289 = vrot.slane %v281, %v288
    %v291 = vunpack.c.l.s4 1966171168
    %v292 = vunpack.c.0.s8 %v291
    %v293 = vlaneseq
    %v294 = vshrl.u32 %v293, 7
    %v295 = vsub.s32 %v292, %v294
    %v296 = vrot.slane %v282, %v295
    %v297 = vcombine.low %v289, %v296
    %v298 = vcombine.low %v139, %v143
    %v299 = vcombine.low %v147, %v151
    %v300 = vcombine.low %v155, %v159
    %v301 = vcombine.low %v163, %v167
    %v303 = vunpack.c.l.s4 1966171168
    %v304 = vunpack.c.0.s8 %v303
    %v305 = vlaneseq
    %v306 = vshrl.u32 %v305, 7
    %v307 = vsub.s32 %v304, %v306
    %v308 = vrot.slane %v298, %v307
    %v310 = vunpack.c.l.s4 1966171168
    %v311 = vunpack.c.0.s8 %v310
    %v312 = vlaneseq
    %v313 = vshrl.u32 %v312, 7
    %v314 = vsub.s32 %v311, %v313
    %v315 = vrot.slane %v299, %v314
    %v317 = vunpack.c.l.s4 1966171168
    %v318 = vunpack.c.0.s8 %v317
    %v319 = vlaneseq
    %v320 = vshrl.u32 %v319, 7
    %v321 = vsub.s32 %v318, %v320
    %v322 = vrot.slane %v300, %v321
    %v324 = vunpack.c.l.s4 1966171168
    %v325 = vunpack.c.0.s8 %v324
    %v326 = vlaneseq
    %v327 = vshrl.u32 %v326, 7
    %v328 = vsub.s32 %v325, %v327
    %v329 = vrot.slane %v301, %v328
    %v330 = vcombine.low %v308, %v315
    %v331 = vcombine.low %v322, %v329
    %v333 = vunpack.c.l.s4 1966171168
    %v334 = vunpack.c.0.s8 %v333
    %v335 = vlaneseq
    %v336 = vshrl.u32 %v335, 7
    %v337 = vsub.s32 %v334, %v336
    %v338 = vrot.slane %v330, %v337
    %v340 = vunpack.c.l.s4 1966171168
    %v341 = vunpack.c.0.s8 %v340
    %v342 = vlaneseq
    %v343 = vshrl.u32 %v342, 7
    %v344 = vsub.s32 %v341, %v343
    %v345 = vrot.slane %v331, %v344
    %v346 = vcombine.low %v338, %v345
    %v347 = vcombine.low %v171, %v175
    %v348 = vcombine.low %v179, %v183
    %v349 = vcombine.low %v187, %v191
    %v350 = vcombine.low %v195, %v199
    %v352 = vunpack.c.l.s4 1966171168
    %v353 = vunpack.c.0.s8 %v352
    %v354 = vlaneseq
    %v355 = vshrl.u32 %v354, 7
    %v356 = vsub.s32 %v353, %v355
    %v357 = vrot.slane %v347, %v356
    %v359 = vunpack.c.l.s4 1966171168
    %v360 = vunpack.c.0.s8 %v359
    %v361 = vlaneseq
    %v362 = vshrl.u32 %v361, 7
    %v363 = vsub.s32 %v360, %v362
    %v364 = vrot.slane %v348, %v363
    %v366 = vunpack.c.l.s4 1966171168
    %v367 = vunpack.c.0.s8 %v366
    %v368 = vlaneseq
    %v369 = vshrl.u32 %v368, 7
    %v370 = vsub.s32 %v367, %v369
    %v371 = vrot.slane %v349, %v370
    %v373 = vunpack.c.l.s4 1966171168
    %v374 = vunpack.c.0.s8 %v373
    %v375 = vlaneseq
    %v376 = vshrl.u32 %v375, 7
    %v377 = vsub.s32 %v374, %v376
    %v378 = vrot.slane %v350, %v377
    %v379 = vcombine.low %v357, %v364
    %v380 = vcombine.low %v371, %v378
    %v382 = vunpack.c.l.s4 1966171168
    %v383 = vunpack.c.0.s8 %v382
    %v384 = vlaneseq
    %v385 = vshrl.u32 %v384, 7
    %v386 = vsub.s32 %v383, %v385
    %v387 = vrot.slane %v379, %v386
    %v389 = vunpack.c.l.s4 1966171168
    %v390 = vunpack.c.0.s8 %v389
    %v391 = vlaneseq
    %v392 = vshrl.u32 %v391, 7
    %v393 = vsub.s32 %v390, %v392
    %v394 = vrot.slane %v380, %v393
    %v395 = vcombine.low %v387, %v394
    %396 = vset.pattern.permute.xlu0 0
    %397 = vperm.xlu0 %396, %v248
    %v398 = vpop.permute.xlu0 %397
    %399 = vset.pattern.permute.xlu0 0
    %400 = vperm.xlu0 %399, %v297
    %v401 = vpop.permute.xlu0 %400
    %402 = vset.pattern.permute.xlu0 0
    %403 = vperm.xlu0 %402, %v346
    %v404 = vpop.permute.xlu0 %403
    %405 = vset.pattern.permute.xlu0 0
    %406 = vperm.xlu0 %405, %v395
    %v407 = vpop.permute.xlu0 %406
    %v408 = vlaneseq
    %v409 = vand.u32 %v408, 127
    %v410 = vlaneseq
    %v411 = vshrl.u32 %v410, 7
    %v412 = vsub.s32 %v409, %v411
    %v413 = vrot.slane %v398, %v412
    %v414 = vadd.s32 %v409, 4294967288
    %v415 = vlaneseq
    %v416 = vshrl.u32 %v415, 7
    %v417 = vsub.s32 %v414, %v416
    %v418 = vrot.slane %v401, %v417
    %vm419 = vcmask 130112
    %v420 = vsel %vm419, %v418, %v413
    %v421 = vadd.s32 %v409, 4294967280
    %v422 = vlaneseq
    %v423 = vshrl.u32 %v422, 7
    %v424 = vsub.s32 %v421, %v423
    %v425 = vrot.slane %v404, %v424
    %vm426 = vcmask 195712
    %v427 = vsel %vm426, %v425, %v420
    %v428 = vadd.s32 %v409, 4294967272
    %v429 = vlaneseq
    %v430 = vshrl.u32 %v429, 7
    %v431 = vsub.s32 %v428, %v430
    %v432 = vrot.slane %v407, %v431
    %vm433 = vcmask 261312
    %v434 = vsel %vm433, %v432, %v427
    %v436 = vunpack.c.l.s4 1966171168
    %v437 = vunpack.c.0.s8 %v436
    %v438 = vlaneseq
    %v439 = vshrl.u32 %v438, 7
    %v440 = vsub.s32 %v437, %v439
    %v441 = vrot.slane %v434, %v440
    %v443 = vunpack.c.l.s4 1966171168
    %v444 = vunpack.c.0.s8 %v443
    %v445 = vlaneseq
    %v446 = vshrl.u32 %v445, 7
    %v447 = vsub.s32 %v444, %v446
    %v448 = vrot.slane %v441, %v447
    %v450 = vadd.f32 %v47, %v448
    %vm451 = vcmask 253952
    %452 = vst.msk [vmem:[#allocation2] sm:$0x1] %vm451, %v450
    // Predicated region
    $region38: #{tpu_custom_call.1} parent=1 // pred_check
      %p453 = pneg %p41
    $region39: #{tpu_custom_call.1} parent=1 // pred_check_branch
      %455 = sbr.rel (%p453) target = $region41
    $region40: #{tpu_custom_call.1} parent=1 // pred_region
      %v456 = vld [vmem:[#allocation2] sm:$0x1]
      %v457 = vmul.f32 %v456, 0.00390625
      %v458 = vld [vmem:[%s1] sm:$0xff]
      %v459 = vld [vmem:[%s1 + $0x8] sm:$0xff]
      %v460 = vld [vmem:[%s1 + $0x10] sm:$0xff]
      %v461 = vld [vmem:[%s1 + $0x18] sm:$0xff]
      %v462 = vld [vmem:[%s2] sm:$0x1]
      %vm463 = vcmask 261120
      %v465 = vsel %vm463, %v457, 0
      %467 = vmatprep.subr.mxu0 0.0
      %468 = vmatpush1.msra.mxu0 %v458
      %469 = vmatprep.subr.mxu0 0.0
      %470 = vmatpush1.msra.mxu0 %v459
      %471 = vmatprep.subr.mxu0 0.0
      %472 = vmatpush1.msra.mxu0 %v460
      %473 = vmatprep.subr.mxu0 0.0
      %474 = vmatpush1.msra.mxu0 %v461
      %475 = vmatprep.subr.mxu0 0.0
      %476 = vmatpush1.msra.mxu0 0.0
      %477 = vmatprep.subr.mxu0 0.0
      %478 = vmatpush1.msra.mxu0 0.0
      %479 = vmatprep.subr.mxu0 0.0
      %480 = vmatpush1.msra.mxu0 0.0
      %481 = vmatprep.subr.mxu0 0.0
      %482 = vmatpush1.msra.mxu0 0.0
      %483 = vmatprep.subr.mxu0 0.0
      %484 = vmatpush1.msra.mxu0 0.0
      %485 = vmatprep.subr.mxu0 0.0
      %486 = vmatpush1.msra.mxu0 0.0
      %487 = vmatprep.subr.mxu0 0.0
      %488 = vmatpush1.msra.mxu0 0.0
      %489 = vmatprep.subr.mxu0 0.0
      %490 = vmatpush1.msra.mxu0 0.0
      %491 = vmatprep.subr.mxu0 0.0
      %492 = vmatpush1.msra.mxu0 0.0
      %493 = vmatprep.subr.mxu0 0.0
      %494 = vmatpush1.msra.mxu0 0.0
      %495 = vmatprep.subr.mxu0 0.0
      %496 = vmatpush1.msra.mxu0 0.0
      %497 = vmatprep.subr.mxu0 0.0
      %498 = vmatpush1.msra.mxu0 0.0
      %499 = vmatprep.subr.mxu0 0.0
      %500 = vmatpush1.msra.mxu0 0.0
      %501 = vmatprep.subr.mxu0 0.0
      %502 = vmatpush1.msra.mxu0 0.0
      %503 = vmatprep.subr.mxu0 0.0
      %504 = vmatpush1.msra.mxu0 0.0
      %505 = vmatprep.subr.mxu0 0.0
      %506 = vmatpush1.msra.mxu0 0.0
      %507 = vmatprep.subr.mxu0 0.0
      %508 = vmatpush1.msra.mxu0 0.0
      %509 = vmatprep.subr.mxu0 0.0
      %510 = vmatpush1.msra.mxu0 0.0
      %511 = vmatprep.subr.mxu0 0.0
      %512 = vmatpush1.msra.mxu0 0.0
      %513 = vmatprep.subr.mxu0 0.0
      %514 = vmatpush1.msra.mxu0 0.0
      %515 = vmatprep.subr.mxu0 0.0
      %516 = vmatpush1.msra.mxu0 0.0
      %517 = vmatprep.subr.mxu0 0.0
      %518 = vmatpush1.msra.mxu0 0.0
      %519 = vmatprep.subr.mxu0 0.0
      %520 = vmatpush1.msra.mxu0 0.0
      %521 = vmatprep.subr.mxu0 0.0
      %522 = vmatpush1.msra.mxu0 0.0
      %523 = vmatprep.subr.mxu0 0.0
      %524 = vmatpush1.msra.mxu0 0.0
      %525 = vmatprep.subr.mxu0 0.0
      %526 = vmatpush1.msra.mxu0 0.0
      %527 = vmatprep.subr.mxu0 0.0
      %528 = vmatpush1.msra.mxu0 0.0
      %529 = vmatprep.subr.mxu0 0.0
      %530 = vmatpush1.msra.mxu0 0.0
      %531 = vmatprep.mubr.f32.mxu0 0.0
      %532 = vmatmul.mubr.f32.gmra.mrb[0].mxu0 %v465
      %v533 = vpop.f32.mrb[0].mxu0
      %v534 = vadd.f32 %v462, %v533
      %v535 = vpop.f32.mrb[0].mxu0
      %536 = vdwg.mxu0
      %v537 = vmax.f32 %v534, 0.0
      %v538 = vld [vmem:[%s3] sm:$0xf]
      %v539 = vld [vmem:[%s4] sm:$0x1]
      %vm540 = vcmask 31744
      %v542 = vsel %vm540, %v537, 0
      %vm544 = vcmask 1043456
      %v546 = vsel %vm544, %v538, 0
      %548 = vmatprep.subr.mxu0 0.0
      %549 = vmatpush1.msra.mxu0 %v546
      %550 = vmatprep.subr.mxu0 0.0
      %551 = vmatpush1.msra.mxu0 0.0
      %552 = vmatprep.subr.mxu0 0.0
      %553 = vmatpush1.msra.mxu0 0.0
      %554 = vmatprep.subr.mxu0 0.0
      %555 = vmatpush1.msra.mxu0 0.0
      %556 = vmatprep.subr.mxu0 0.0
      %557 = vmatpush1.msra.mxu0 0.0
      %558 = vmatprep.subr.mxu0 0.0
      %559 = vmatpush1.msra.mxu0 0.0
      %560 = vmatprep.subr.mxu0 0.0
      %561 = vmatpush1.msra.mxu0 0.0
      %562 = vmatprep.subr.mxu0 0.0
      %563 = vmatpush1.msra.mxu0 0.0
      %564 = vmatprep.subr.mxu0 0.0
      %565 = vmatpush1.msra.mxu0 0.0
      %566 = vmatprep.subr.mxu0 0.0
      %567 = vmatpush1.msra.mxu0 0.0
      %568 = vmatprep.subr.mxu0 0.0
      %569 = vmatpush1.msra.mxu0 0.0
      %570 = vmatprep.subr.mxu0 0.0
      %571 = vmatpush1.msra.mxu0 0.0
      %572 = vmatprep.subr.mxu0 0.0
      %573 = vmatpush1.msra.mxu0 0.0
      %574 = vmatprep.subr.mxu0 0.0
      %575 = vmatpush1.msra.mxu0 0.0
      %576 = vmatprep.subr.mxu0 0.0
      %577 = vmatpush1.msra.mxu0 0.0
      %578 = vmatprep.subr.mxu0 0.0
      %579 = vmatpush1.msra.mxu0 0.0
      %580 = vmatprep.subr.mxu0 0.0
      %581 = vmatpush1.msra.mxu0 0.0
      %582 = vmatprep.subr.mxu0 0.0
      %583 = vmatpush1.msra.mxu0 0.0
      %584 = vmatprep.subr.mxu0 0.0
      %585 = vmatpush1.msra.mxu0 0.0
      %586 = vmatprep.subr.mxu0 0.0
      %587 = vmatpush1.msra.mxu0 0.0
      %588 = vmatprep.subr.mxu0 0.0
      %589 = vmatpush1.msra.mxu0 0.0
      %590 = vmatprep.subr.mxu0 0.0
      %591 = vmatpush1.msra.mxu0 0.0
      %592 = vmatprep.subr.mxu0 0.0
      %593 = vmatpush1.msra.mxu0 0.0
      %594 = vmatprep.subr.mxu0 0.0
      %595 = vmatpush1.msra.mxu0 0.0
      %596 = vmatprep.subr.mxu0 0.0
      %597 = vmatpush1.msra.mxu0 0.0
      %598 = vmatprep.subr.mxu0 0.0
      %599 = vmatpush1.msra.mxu0 0.0
      %600 = vmatprep.subr.mxu0 0.0
      %601 = vmatpush1.msra.mxu0 0.0
      %602 = vmatprep.subr.mxu0 0.0
      %603 = vmatpush1.msra.mxu0 0.0
      %604 = vmatprep.subr.mxu0 0.0
      %605 = vmatpush1.msra.mxu0 0.0
      %606 = vmatprep.subr.mxu0 0.0
      %607 = vmatpush1.msra.mxu0 0.0
      %608 = vmatprep.subr.mxu0 0.0
      %609 = vmatpush1.msra.mxu0 0.0
      %610 = vmatprep.subr.mxu0 0.0
      %611 = vmatpush1.msra.mxu0 0.0
      %612 = vmatprep.mubr.f32.mxu0 0.0
      %613 = vmatmul.mubr.f32.gmra.mrb[0].mxu0 %v542
      %v614 = vpop.f32.mrb[0].mxu0
      %v615 = vadd.f32 %v539, %v614
      %v616 = vpop.f32.mrb[0].mxu0
      %617 = vdwg.mxu0
      %v618 = vxor.u32 %v615, 2147483648
      %v619 = vmul.f32 %v618, 1.442695
      %v620 = vpow.pop %v619
      %v621 = vadd.f32 %v620, 1.0
      %v622 = vrcp.pop %v621
      %v623 = vmul.f32 1.0, %v622
      %v624 = vmul.f32 %v623, 2.0
      %v625 = vsub.f32 %v624, 1.0
      %v626 = vld [vmem:[%s6] sm:$0x1]
      %v627 = vld [vmem:[%s5] sm:$0x1]
      %v628 = vmul.f32 %v627, %v625
      %v629 = vadd.f32 %v626, %v628
      %vm630 = vcmask 24576
      %631 = vst.msk [vmem:[#allocation6] sm:$0x1] %vm630, %v629
    $region41: #{tpu_custom_call.1} parent=1 // pred_fallthru
      _
    // Predicated region
    $region42: #{tpu_custom_call.1} parent=1 // pred_check
      _
    $region43: #{tpu_custom_call.1} parent=1 // pred_check_branch
      %633 = sbr.rel (0) target = $region45
    $region44: #{tpu_custom_call.1} parent=1 // pred_region
      %s635 = ssub.s32 16, 16
      %636 = vsyncadd [#allocation5], %s635
      %s638 = sshll.u32 [#allocation6], 4
      %s639 = int_to_ptr.vmem [resolvable:$true] %s638
      %641 = dma.vmem_to_hbm [thread:$0]  %s639, 16, %s7, [#allocation5]
    $region45: #{tpu_custom_call.1} parent=1 // pred_fallthru
      _
    // Predicated region
    $region46: #{tpu_custom_call.1} parent=1 // pred_check
      _
    $region47: #{tpu_custom_call.1} parent=1 // pred_check_branch
      %643 = sbr.rel (0) target = $region49
    $region48: #{tpu_custom_call.1} parent=1 // pred_region
      %644 = dma.done [#allocation5], 16
    $region49: #{tpu_custom_call.1} parent=1 // pred_fallthru
      _
    %645 = vsyncpa [#allocation4], 1
    %646 = vsyncpa [#allocation5], 1

</llo_original>
